<compile_context>
chip_gen: v7x
topology: tpu7x:2x2x1
jax: 0.10.0
libtpu: 0.0.40
codegen_flags: <defaults>
</compile_context>

<pallas_src>
import math

import jax
import jax.numpy as jnp
from jax import lax
from jax.experimental import pallas as pl
from jax.experimental.pallas import tpu as pltpu

TEMPERATURE = 12.5


def _deepemd_kernel(q_ref, p_ref, logits_ref, w1_ref, w2_ref, sim_ref):
    """Per-(batch, query-tile) DeepEMD similarity kernel.

    q_ref      : (1, TQ, HW, C)      query features (channels on lanes)
    p_ref      : (1, N,  HW, C)      prototype (support, shot 0) features
    logits_ref : (1, TQ, N)
    w1_ref     : (1, N,  TQ*HW)      lane-dense slab of weight_1
    w2_ref     : (1, TQ, N*HW)       lane-dense slab of weight_2
    sim_ref    : (1, TQ*HW, N*HW)    lane-dense slab of the cosine similarity map
    """
    TQ, HW, C = q_ref.shape[1], q_ref.shape[2], q_ref.shape[3]
    N = p_ref.shape[1]
    scale = TEMPERATURE / HW
    dn = (((1,), (1,)), ((), ()))          # contract the channel dim of both operands

    qx = q_ref[0]                          # (TQ, HW, C)
    px = p_ref[0]                          # (N,  HW, C)

    # GAP over spatial nodes (get_weight_vector's adaptive_avg_pool2d)
    q_gap = jnp.mean(qx, axis=1)           # (TQ, C)
    p_gap = jnp.mean(px, axis=1)           # (N,  C)

    q_flat = qx.reshape(TQ * HW, C)
    p_flat = px.reshape(N * HW, C)

    # get_weight_vector: <node feature, GAP of the other set>, relu, +1e-3
    # -> two batched MXU matmuls, two contiguous lane-dense stores.
    w1 = lax.dot_general(p_gap, q_flat, dn, preferred_element_type=jnp.float32)  # (N, TQ*HW)
    w2 = lax.dot_general(q_gap, p_flat, dn, preferred_element_type=jnp.float32)  # (TQ, N*HW)
    w1_ref[0] = jnp.maximum(w1, 0.0) + 1e-3
    w2_ref[0] = jnp.maximum(w2, 0.0) + 1e-3

    # normalize_feature: subtract per-node channel mean (lane reduction),
    # then cosine prep: L2-normalize each node over channels.  Hoisted: done
    # exactly once per tile for the queries and once for all prototypes.
    qn = qx - jnp.mean(qx, axis=2, keepdims=True)
    pn = px - jnp.mean(px, axis=2, keepdims=True)
    qn = qn / jnp.maximum(jnp.sqrt(jnp.sum(qn * qn, axis=2, keepdims=True)), 1e-8)
    pn = pn / jnp.maximum(jnp.sqrt(jnp.sum(pn * pn, axis=2, keepdims=True)), 1e-8)

    qn_flat = qn.reshape(TQ * HW, C)
    pn_flat = pn.reshape(N * HW, C)

    # Full cosine similarity map for this tile as ONE MXU matmul:
    # S[m*HW + a, n*HW + b] = <qn[m,:,a], pn[n,:,b]>
    sim_ref[0] = lax.dot_general(qn_flat, pn_flat, dn,
                                 preferred_element_type=jnp.float32)

    # TODO(synk): cv2.EMD flow re-weighting skipped (CPU LP solver, no Pallas eq.)
    # logits via sum-of-sums identity (no readback of the similarity slab):
    #   sum_{a,b} <qn_a, pn_b> = <sum_a qn_a, sum_b pn_b>
    qn_sum = jnp.sum(qn, axis=1)           # (TQ, C)
    pn_sum = jnp.sum(pn, axis=1)           # (N,  C)
    logits = lax.dot_general(qn_sum, pn_sum, dn, preferred_element_type=jnp.float32)
    logits_ref[0] = (logits * scale).astype(logits_ref.dtype)


def deepemd_logits(support_xf, query_xf, n_way, k_shot, tq=None):
    """Returns (logits[b*q, n_way], weight_1, weight_2, similarity_map)."""
    b, s, c, h, w = support_xf.shape
    q = query_xf.shape[1]
    HW = h * w

    # training / 1-shot path of forward(): take shot 0 per class.
    # Layout: channels last (lane dim) -> (b, n, HW, c) / (b, q, HW, c).
    proto = support_xf.reshape(b, n_way, k_shot, c, h, w)[:, :, 0]
    proto = jnp.transpose(proto.reshape(b, n_way, c, HW), (0, 1, 3, 2)).astype(jnp.float32)
    query = jnp.transpose(query_xf.reshape(b, q, c, HW), (0, 1, 3, 2)).astype(jnp.float32)

    # Optional query tiling (megacore / v7x VMEM).  tq must either be the full q
    # or keep the output block dims aligned to the (8, 128) tiling.
    if tq is None:
        tq = q
    assert q % tq == 0
    assert tq == q or (tq % 8 == 0 and (tq * HW) % 128 == 0), "invalid query tile"
    n_qt = q // tq

    out_shapes = (
        jax.ShapeDtypeStruct((b, q, n_way), jnp.float32),            # logits
        jax.ShapeDtypeStruct((b, n_way, q * HW), jnp.float32),       # weight_1 slab
        jax.ShapeDtypeStruct((b, q, n_way * HW), jnp.float32),       # weight_2 slab
        jax.ShapeDtypeStruct((b, q * HW, n_way * HW), jnp.float32),  # similarity slab
    )

    grid_spec = pltpu.PrefetchScalarGridSpec(
        num_scalar_prefetch=0,
        grid=(b, n_qt),
        in_specs=[
            pl.BlockSpec((1, tq, HW, c), lambda i, j: (i, j, 0, 0)),     # query tile
            pl.BlockSpec((1, n_way, HW, c), lambda i, j: (i, 0, 0, 0)),  # full proto
        ],
        out_specs=[
            pl.BlockSpec((1, tq, n_way), lambda i, j: (i, j, 0)),
            pl.BlockSpec((1, n_way, tq * HW), lambda i, j: (i, 0, j)),
            pl.BlockSpec((1, tq, n_way * HW), lambda i, j: (i, j, 0)),
            pl.BlockSpec((1, tq * HW, n_way * HW), lambda i, j: (i, j, 0)),
        ],
    )

    # Explicit VMEM budget: double-buffered I/O blocks + headroom for intermediates.
    io_bytes = 4 * sum(math.prod(shape) for shape in (
        (1, tq, HW, c), (1, n_way, HW, c),
        (1, tq, n_way), (1, n_way, tq * HW),
        (1, tq, n_way * HW), (1, tq * HW, n_way * HW)))
    vmem_limit = int(min(100 * 1024 * 1024, max(32 * 1024 * 1024, 4 * io_bytes)))

    logits, w1s, w2s, sims = pl.pallas_call(
        _deepemd_kernel,
        out_shape=out_shapes,
        grid_spec=grid_spec,
        compiler_params=pltpu.CompilerParams(
            dimension_semantics=("parallel", "parallel"),
            vmem_limit_bytes=vmem_limit),
    )(query, proto)

    # Reshape the lane-dense slabs back to the PyTorch module's layouts.
    w1 = jnp.transpose(w1s.reshape(b, n_way, q, HW), (0, 2, 1, 3))          # (b, q, n, HW)
    w2 = jnp.transpose(w2s.reshape(b, q, n_way, HW), (0, 2, 1, 3))          # (b, n, q, HW)
    sim = jnp.transpose(sims.reshape(b, q, HW, n_way, HW), (0, 1, 3, 2, 4))  # (b,q,n,HW,HW)
    return logits.reshape(b * q, n_way), w1, w2, sim


def deepemd_reference(support_xf, query_xf, n_way, k_shot):
    """Pure-JAX reference mirroring the PyTorch math (for validation)."""
    b, s, c, h, w = support_xf.shape
    q = query_xf.shape[1]
    HW = h * w
    proto = support_xf.reshape(b, n_way, k_shot, c, h, w)[:, :, 0].reshape(b, n_way, c, HW)
    query = query_xf.reshape(b, q, c, HW)

    p_gap = proto.mean(-1)                                       # (b, n, c)
    q_gap = query.mean(-1)                                       # (b, q, c)
    w1 = jnp.maximum(jnp.einsum('bmca,bnc->bmna', query, p_gap), 0.0) + 1e-3
    w2 = jnp.maximum(jnp.einsum('bnca,bmc->bnma', proto, q_gap), 0.0) + 1e-3

    qn = query - query.mean(2, keepdims=True)
    pn = proto - proto.mean(2, keepdims=True)
    qn = qn / jnp.maximum(jnp.sqrt((qn * qn).sum(2, keepdims=True)), 1e-8)
    pn = pn / jnp.maximum(jnp.sqrt((pn * pn).sum(2, keepdims=True)), 1e-8)
    sim = jnp.einsum('bmca,bncd->bmnad', qn, pn)
    logits = sim.sum(-1).sum(-1) * (TEMPERATURE / HW)
    return logits.reshape(b * q, n_way), w1, w2, sim


if __name__ == "__main__":
    key = jax.random.PRNGKey(0)
    b, n_way, k_shot, q, c, h, w = 2, 2, 1, 3, 8, 4, 4
    s = n_way * k_shot

    k1, k2, k3 = jax.random.split(key, 3)
    support_xf = jax.random.normal(k1, (b, s, c, h, w), dtype=jnp.float32)
    query_xf = jax.random.normal(k2, (b, q, c, h, w), dtype=jnp.float32)
    support_y = jnp.tile(jnp.arange(n_way, dtype=jnp.int32), (b, k_shot)).reshape(b, s)
    query_y = jax.random.randint(k3, (b, q), 0, n_way)

    logits, w1, w2, sim = deepemd_logits(support_xf, query_xf, n_way, k_shot)
    jax.block_until_ready(logits)

    ref_logits, ref_w1, ref_w2, ref_sim = deepemd_reference(support_xf, query_xf, n_way, k_shot)
    assert jnp.allclose(logits, ref_logits, atol=1e-3, rtol=1e-3), "logits mismatch"
    assert jnp.allclose(w1, ref_w1, atol=1e-3, rtol=1e-3), "weight_1 mismatch"
    assert jnp.allclose(w2, ref_w2, atol=1e-3, rtol=1e-3), "weight_2 mismatch"
    assert jnp.allclose(sim, ref_sim, atol=1e-3, rtol=1e-3), "similarity map mismatch"

    # eval-mode output of forward(): per-query rewards (glue, outside the kernel)
    predict_labels = jnp.argmax(logits, axis=1)
    qy = query_y.reshape(-1)
    rewards = [1 if int(predict_labels[j]) == int(qy[j]) else 0 for j in range(b * q)]
    assert len(rewards) == b * q

    print("KERNEL_OK")
</pallas_src>

<mosaic_0001>
module attributes {stable_mosaic.version = 11 : i64} {
  func.func @_deepemd_kernel(%arg0: i32, %arg1: i32, %arg2: memref<1x3x16x8xf32, #tpu.memory_space<vmem>>, %arg3: memref<1x2x16x8xf32, #tpu.memory_space<vmem>>, %arg4: memref<1x3x2xf32, #tpu.memory_space<vmem>>, %arg5: memref<1x2x48xf32, #tpu.memory_space<vmem>>, %arg6: memref<1x3x32xf32, #tpu.memory_space<vmem>>, %arg7: memref<1x48x32xf32, #tpu.memory_space<vmem>>) attributes {dimension_semantics = [#tpu.dimension_semantics<parallel>, #tpu.dimension_semantics<parallel>], iteration_bounds = array<i64: 2, 1>, scalar_prefetch = 0 : i64, scratch_operands = 0 : i64, tpu.core_type = #tpu.core_type<tc>, window_params = [{transform_indices = @transform_0, window_bounds = array<i64: 1, 3, 16, 8>}, {transform_indices = @transform_1, window_bounds = array<i64: 1, 2, 16, 8>}, {transform_indices = @transform_2, window_bounds = array<i64: 1, 3, 2>}, {transform_indices = @transform_3, window_bounds = array<i64: 1, 2, 48>}, {transform_indices = @transform_4, window_bounds = array<i64: 1, 3, 32>}, {transform_indices = @transform_5, window_bounds = array<i64: 1, 48, 32>}]} {
    %c0 = arith.constant 0 : index
    %c0_0 = arith.constant 0 : index
    %c0_1 = arith.constant 0 : index
    %c0_2 = arith.constant 0 : index
    %0 = vector.load %arg2[%c0, %c0_0, %c0_1, %c0_2] : memref<1x3x16x8xf32, #tpu.memory_space<vmem>>, vector<1x3x16x8xf32>
    %1 = vector.shape_cast %0 : vector<1x3x16x8xf32> to vector<3x16x8xf32>
    %c0_3 = arith.constant 0 : index
    %c0_4 = arith.constant 0 : index
    %c0_5 = arith.constant 0 : index
    %c0_6 = arith.constant 0 : index
    %2 = vector.load %arg3[%c0_3, %c0_4, %c0_5, %c0_6] : memref<1x2x16x8xf32, #tpu.memory_space<vmem>>, vector<1x2x16x8xf32>
    %3 = vector.shape_cast %2 : vector<1x2x16x8xf32> to vector<2x16x8xf32>
    %cst = arith.constant dense<0.000000e+00> : vector<3x8xf32>
    %4 = vector.multi_reduction <add>, %1, %cst [1] : vector<3x16x8xf32> to vector<3x8xf32>
    %cst_7 = arith.constant 1.600000e+01 : f32
    %5 = vector.broadcast %cst_7 : f32 to vector<3x8xf32>
    %6 = arith.divf %4, %5 : vector<3x8xf32>
    %cst_8 = arith.constant dense<0.000000e+00> : vector<2x8xf32>
    %7 = vector.multi_reduction <add>, %3, %cst_8 [1] : vector<2x16x8xf32> to vector<2x8xf32>
    %cst_9 = arith.constant 1.600000e+01 : f32
    %8 = vector.broadcast %cst_9 : f32 to vector<2x8xf32>
    %9 = arith.divf %7, %8 : vector<2x8xf32>
    %10 = vector.shape_cast %1 : vector<3x16x8xf32> to vector<48x8xf32>
    %11 = vector.shape_cast %3 : vector<2x16x8xf32> to vector<32x8xf32>
    %cst_10 = arith.constant dense<0.000000e+00> : vector<2x48xf32>
    %12 = tpu.matmul %9, %10, %cst_10 {dimension_numbers = #tpu.dot_dimension_numbers<[1], [1], [0], [0], [0, 0, 1, 0], [], []>} : vector<2x8xf32>, vector<48x8xf32>, vector<2x48xf32> -> vector<2x48xf32>
    %cst_11 = arith.constant dense<0.000000e+00> : vector<3x32xf32>
    %13 = tpu.matmul %6, %11, %cst_11 {dimension_numbers = #tpu.dot_dimension_numbers<[1], [1], [0], [0], [0, 0, 1, 0], [], []>} : vector<3x8xf32>, vector<32x8xf32>, vector<3x32xf32> -> vector<3x32xf32>
    %cst_12 = arith.constant 0.000000e+00 : f32
    %14 = vector.broadcast %cst_12 : f32 to vector<2x48xf32>
    %15 = arith.maximumf %12, %14 : vector<2x48xf32>
    %cst_13 = arith.constant 1.000000e-03 : f32
    %16 = vector.broadcast %cst_13 : f32 to vector<2x48xf32>
    %17 = arith.addf %15, %16 : vector<2x48xf32>
    %c0_14 = arith.constant 0 : index
    %c0_15 = arith.constant 0 : index
    %c0_16 = arith.constant 0 : index
    %18 = vector.load %arg5[%c0_14, %c0_15, %c0_16] : memref<1x2x48xf32, #tpu.memory_space<vmem>>, vector<1x2x48xf32>
    %19 = vector.shape_cast %18 : vector<1x2x48xf32> to vector<2x48xf32>
    %20 = vector.shape_cast %17 : vector<2x48xf32> to vector<1x2x48xf32>
    tpu.vector_store %arg5[%c0_14, %c0_15, %c0_16], %20 {strides = array<i32>} : memref<1x2x48xf32, #tpu.memory_space<vmem>>, vector<1x2x48xf32>,
    %cst_17 = arith.constant 0.000000e+00 : f32
    %21 = vector.broadcast %cst_17 : f32 to vector<3x32xf32>
    %22 = arith.maximumf %13, %21 : vector<3x32xf32>
    %cst_18 = arith.constant 1.000000e-03 : f32
    %23 = vector.broadcast %cst_18 : f32 to vector<3x32xf32>
    %24 = arith.addf %22, %23 : vector<3x32xf32>
    %c0_19 = arith.constant 0 : index
    %c0_20 = arith.constant 0 : index
    %c0_21 = arith.constant 0 : index
    %25 = vector.load %arg6[%c0_19, %c0_20, %c0_21] : memref<1x3x32xf32, #tpu.memory_space<vmem>>, vector<1x3x32xf32>
    %26 = vector.shape_cast %25 : vector<1x3x32xf32> to vector<3x32xf32>
    %27 = vector.shape_cast %24 : vector<3x32xf32> to vector<1x3x32xf32>
    tpu.vector_store %arg6[%c0_19, %c0_20, %c0_21], %27 {strides = array<i32>} : memref<1x3x32xf32, #tpu.memory_space<vmem>>, vector<1x3x32xf32>,
    %cst_22 = arith.constant dense<0.000000e+00> : vector<3x16xf32>
    %28 = vector.multi_reduction <add>, %1, %cst_22 [2] : vector<3x16x8xf32> to vector<3x16xf32>
    %29 = vector.shape_cast %28 : vector<3x16xf32> to vector<3x16x1xf32>
    %cst_23 = arith.constant 8.000000e+00 : f32
    %30 = vector.broadcast %cst_23 : f32 to vector<3x16x1xf32>
    %31 = arith.divf %29, %30 : vector<3x16x1xf32>
    %32 = vector.broadcast %31 : vector<3x16x1xf32> to vector<3x16x8xf32>
    %33 = arith.subf %1, %32 : vector<3x16x8xf32>
    %cst_24 = arith.constant dense<0.000000e+00> : vector<2x16xf32>
    %34 = vector.multi_reduction <add>, %3, %cst_24 [2] : vector<2x16x8xf32> to vector<2x16xf32>
    %35 = vector.shape_cast %34 : vector<2x16xf32> to vector<2x16x1xf32>
    %cst_25 = arith.constant 8.000000e+00 : f32
    %36 = vector.broadcast %cst_25 : f32 to vector<2x16x1xf32>
    %37 = arith.divf %35, %36 : vector<2x16x1xf32>
    %38 = vector.broadcast %37 : vector<2x16x1xf32> to vector<2x16x8xf32>
    %39 = arith.subf %3, %38 : vector<2x16x8xf32>
    %40 = arith.mulf %33, %33 : vector<3x16x8xf32>
    %cst_26 = arith.constant dense<0.000000e+00> : vector<3x16xf32>
    %41 = vector.multi_reduction <add>, %40, %cst_26 [2] : vector<3x16x8xf32> to vector<3x16xf32>
    %42 = vector.shape_cast %41 : vector<3x16xf32> to vector<3x16x1xf32>
    %43 = math.sqrt %42 : vector<3x16x1xf32>
    %cst_27 = arith.constant 9.99999993E-9 : f32
    %44 = vector.broadcast %cst_27 : f32 to vector<3x16x1xf32>
    %45 = arith.maximumf %43, %44 : vector<3x16x1xf32>
    %46 = vector.broadcast %45 : vector<3x16x1xf32> to vector<3x16x8xf32>
    %47 = arith.divf %33, %46 : vector<3x16x8xf32>
    %48 = arith.mulf %39, %39 : vector<2x16x8xf32>
    %cst_28 = arith.constant dense<0.000000e+00> : vector<2x16xf32>
    %49 = vector.multi_reduction <add>, %48, %cst_28 [2] : vector<2x16x8xf32> to vector<2x16xf32>
    %50 = vector.shape_cast %49 : vector<2x16xf32> to vector<2x16x1xf32>
    %51 = math.sqrt %50 : vector<2x16x1xf32>
    %cst_29 = arith.constant 9.99999993E-9 : f32
    %52 = vector.broadcast %cst_29 : f32 to vector<2x16x1xf32>
    %53 = arith.maximumf %51, %52 : vector<2x16x1xf32>
    %54 = vector.broadcast %53 : vector<2x16x1xf32> to vector<2x16x8xf32>
    %55 = arith.divf %39, %54 : vector<2x16x8xf32>
    %56 = vector.shape_cast %47 : vector<3x16x8xf32> to vector<48x8xf32>
    %57 = vector.shape_cast %55 : vector<2x16x8xf32> to vector<32x8xf32>
    %cst_30 = arith.constant dense<0.000000e+00> : vector<48x32xf32>
    %58 = tpu.matmul %56, %57, %cst_30 {dimension_numbers = #tpu.dot_dimension_numbers<[1], [1], [0], [0], [0, 0, 1, 0], [], []>} : vector<48x8xf32>, vector<32x8xf32>, vector<48x32xf32> -> vector<48x32xf32>
    %c0_31 = arith.constant 0 : index
    %c0_32 = arith.constant 0 : index
    %c0_33 = arith.constant 0 : index
    %59 = vector.load %arg7[%c0_31, %c0_32, %c0_33] : memref<1x48x32xf32, #tpu.memory_space<vmem>>, vector<1x48x32xf32>
    %60 = vector.shape_cast %59 : vector<1x48x32xf32> to vector<48x32xf32>
    %61 = vector.shape_cast %58 : vector<48x32xf32> to vector<1x48x32xf32>
    tpu.vector_store %arg7[%c0_31, %c0_32, %c0_33], %61 {strides = array<i32>} : memref<1x48x32xf32, #tpu.memory_space<vmem>>, vector<1x48x32xf32>,
    %cst_34 = arith.constant dense<0.000000e+00> : vector<3x8xf32>
    %62 = vector.multi_reduction <add>, %47, %cst_34 [1] : vector<3x16x8xf32> to vector<3x8xf32>
    %cst_35 = arith.constant dense<0.000000e+00> : vector<2x8xf32>
    %63 = vector.multi_reduction <add>, %55, %cst_35 [1] : vector<2x16x8xf32> to vector<2x8xf32>
    %cst_36 = arith.constant dense<0.000000e+00> : vector<3x2xf32>
    %64 = tpu.matmul %62, %63, %cst_36 {dimension_numbers = #tpu.dot_dimension_numbers<[1], [1], [0], [0], [0, 0, 1, 0], [], []>} : vector<3x8xf32>, vector<2x8xf32>, vector<3x2xf32> -> vector<3x2xf32>
    %cst_37 = arith.constant 7.812500e-01 : f32
    %65 = vector.broadcast %cst_37 : f32 to vector<3x2xf32>
    %66 = arith.mulf %64, %65 : vector<3x2xf32>
    %c0_38 = arith.constant 0 : index
    %c0_39 = arith.constant 0 : index
    %c0_40 = arith.constant 0 : index
    %67 = vector.load %arg4[%c0_38, %c0_39, %c0_40] : memref<1x3x2xf32, #tpu.memory_space<vmem>>, vector<1x3x2xf32>
    %68 = vector.shape_cast %67 : vector<1x3x2xf32> to vector<3x2xf32>
    %69 = vector.shape_cast %66 : vector<3x2xf32> to vector<1x3x2xf32>
    tpu.vector_store %arg4[%c0_38, %c0_39, %c0_40], %69 {strides = array<i32>} : memref<1x3x2xf32, #tpu.memory_space<vmem>>, vector<1x3x2xf32>,
    return
  }
  func.func @transform_0(%arg0: i32, %arg1: i32) -> (i32, i32, i32, i32) {
    %c0_i32 = arith.constant 0 : i32
    %c0_i32_0 = arith.constant 0 : i32
    %c0_i32_1 = arith.constant 0 : i32
    return %arg0, %arg1, %c0_i32, %c0_i32_0 : i32, i32, i32, i32
  }
  func.func @transform_1(%arg0: i32, %arg1: i32) -> (i32, i32, i32, i32) {
    %c0_i32 = arith.constant 0 : i32
    %c0_i32_0 = arith.constant 0 : i32
    %c0_i32_1 = arith.constant 0 : i32
    %c0_i32_2 = arith.constant 0 : i32
    return %arg0, %c0_i32, %c0_i32_0, %c0_i32_1 : i32, i32, i32, i32
  }
  func.func @transform_2(%arg0: i32, %arg1: i32) -> (i32, i32, i32) {
    %c0_i32 = arith.constant 0 : i32
    %c0_i32_0 = arith.constant 0 : i32
    return %arg0, %arg1, %c0_i32 : i32, i32, i32
  }
  func.func @transform_3(%arg0: i32, %arg1: i32) -> (i32, i32, i32) {
    %c0_i32 = arith.constant 0 : i32
    %c0_i32_0 = arith.constant 0 : i32
    return %arg0, %c0_i32, %arg1 : i32, i32, i32
  }
  func.func @transform_4(%arg0: i32, %arg1: i32) -> (i32, i32, i32) {
    %c0_i32 = arith.constant 0 : i32
    %c0_i32_0 = arith.constant 0 : i32
    return %arg0, %arg1, %c0_i32 : i32, i32, i32
  }
  func.func @transform_5(%arg0: i32, %arg1: i32) -> (i32, i32, i32) {
    %c0_i32 = arith.constant 0 : i32
    %c0_i32_0 = arith.constant 0 : i32
    return %arg0, %arg1, %c0_i32 : i32, i32, i32
  }
}

</mosaic_0001>

<llo_original>
// kernel: tpu_custom_call.1
$region0: #{tpu_custom_call.1}
  #allocation0 [shape = 'u32[]', space=smem, size = 0x4, offset = 0x4, fixed_abs, tag = 'smem constant byte address 0x4 - core index']
  #allocation1 [shape = 'u32[144,128]{1,0:T(1,128)}', space=vmem, size = 0x12000, scoped, tag = 'internal scratch']
  %s0 = inlined_call_operand.vmem [shape: f32[2,3,16,8], index: 0, kind: input, shape index: {}]
  %s1 = inlined_call_operand.vmem [shape: f32[2,2,16,8], index: 1, kind: input, shape index: {}]
  %s2 = inlined_call_operand.vmem [shape: f32[2,3,2], index: 2, kind: output, shape index: {0}]
  %s3 = inlined_call_operand.hbm [shape: f32[2,2,48], index: 3, kind: output, shape index: {1}]
  %s4 = inlined_call_operand.vmem [shape: f32[2,3,32], index: 4, kind: output, shape index: {2}]
  %s5 = inlined_call_operand.vmem [shape: f32[2,48,32], index: 5, kind: output, shape index: {3}]
  %6 = xla_tuple %s2, %s3, %s4, %s5
  %s7 = sld [smem:[#allocation0]]
  $region65: #{tpu_custom_call.1} parent=0
    _
  %s9 = ssub.s32 1, %s7
  %s10 = scalar_select 0, %s9, %s7
  $region1: #{tpu_custom_call.1} parent=0
    #allocation2 [shape = 'u8[2048]{0}', space=vmem, size = 0x800, scoped, tag = 'output window, operand 1']
    #allocation3 [shape = 's32[2]{0}', space=sflag, size = 0x8, scoped, tag = 'scoped memory for tpu_custom_call.1']
    %11 = vsyncpa [#allocation3], 0
    %s12 = scalar_lea.sflag [#allocation3], 1
    %13 = vsyncpa %s12, 0
    loop: start=0, step=1, limit=4
    $region2: #{tpu_custom_call.1} parent=1 // loop_pre_header
      _
    $region3: #{tpu_custom_call.1} parent=1 // loop_header
      %s15 = sphi 0, %s19
      %p16 = scmp.ge.s32.totalorder %s15, 4
      %s22 = sphi 0, %s34
      %s23 = sphi 0, %s30
      %s24 = sphi 0, %s22
      %s25 = sphi 0, %s23
      %s26 = sphi 0, %s24
      %s27 = sphi 0, %s25
      %s39 = sphi 0, %s41
      %s42 = sphi 0, %s39
      %s43 = sphi 0, %s42
      %s59 = sphi 0, %s43
      %s65 = sphi 0, %s67
      %s68 = sphi 0, %s65
      %s69 = sphi 0, %s68
      %s85 = sphi 0, %s69
      %s93 = sphi 0, %s95
      %s96 = sphi 0, %s93
      %s97 = sphi 0, %s96
      %s113 = sphi 0, %s97
      %s121 = sphi 0, %s123
      %s124 = sphi 0, %s121
      %s125 = sphi 0, %s124
      %s141 = sphi 0, %s125
      %s149 = sphi 0, %s151
      %s152 = sphi 0, %s149
      %s153 = sphi 0, %s152
      %s169 = sphi 0, %s153
      %s177 = sphi 0, %s179
      %s180 = sphi 0, %s177
      %s181 = sphi 0, %s180
      %s197 = sphi 0, %s181
    $region4: #{tpu_custom_call.1} parent=1 // loop_header_branch
      %18 = sbr.rel (%p16) target = $region8
    $region5: #{tpu_custom_call.1} parent=1 // loop_body
      %s20 = ssub.s32 %s15, 1
      %s21 = ssub.s32 %s15, 2
      %s28 = sadd.s32 1, %s23
      %p29 = scmp.ge.s32.totalorder %s28, 1
      %s30 = scalar_select %p29, 0, %s28
      %s31 = sadd.s32 1, %s22
      %s32 = scalar_select %p29, %s31, %s22
      %p33 = scmp.ge.s32.totalorder %s32, 2
      %s34 = scalar_select %p33, 0, %s32
      %s35 = ssub.s32 %s22, %s34
      %s36 = ssub.s32 %s23, %s30
      %s37 = sor.u32 %s35, %s36
      %p38 = scmp.eq.s32.totalorder %s37, 0
      %s40 = sadd.s32 %s39, 1
      %s41 = scalar_select %p38, %s39, %s40
      %p44 = pneg %p38
      %p45 = scmp.eq.s32.totalorder %s15, 1
      %p46 = por %p44, %p45
      %p47 = scmp.ne.s32.totalorder %s39, %s42
      %p48 = scmp.eq.s32.totalorder %s15, 0
      %p49 = por %p47, %p48
      %p50 = scmp.ne.s32.totalorder %s39, %s42
      %p51 = scmp.eq.s32.totalorder %s20, 1
      %p52 = por %p50, %p51
      %p53 = scmp.ne.s32.totalorder %s42, %s43
      %p54 = scmp.eq.s32.totalorder %s20, 0
      %p55 = por %p53, %p54
      %p56 = scmp.ne.s32.totalorder %s42, %s43
      %p57 = scmp.eq.s32.totalorder %s21, 1
      %p58 = por %p56, %p57
      %p60 = scmp.ne.s32.totalorder %s43, %s59
      %p61 = scmp.eq.s32.totalorder %s21, 0
      %p62 = por %p60, %p61
      %s63 = ssub.s32 %s22, %s34
      %p64 = scmp.eq.s32.totalorder %s63, 0
      %s66 = sadd.s32 %s65, 1
      %s67 = scalar_select %p64, %s65, %s66
      %p70 = pneg %p64
      %p71 = scmp.eq.s32.totalorder %s15, 1
      %p72 = por %p70, %p71
      %p73 = scmp.ne.s32.totalorder %s65, %s68
      %p74 = scmp.eq.s32.totalorder %s15, 0
      %p75 = por %p73, %p74
      %p76 = scmp.ne.s32.totalorder %s65, %s68
      %p77 = scmp.eq.s32.totalorder %s20, 1
      %p78 = por %p76, %p77
      %p79 = scmp.ne.s32.totalorder %s68, %s69
      %p80 = scmp.eq.s32.totalorder %s20, 0
      %p81 = por %p79, %p80
      %p82 = scmp.ne.s32.totalorder %s68, %s69
      %p83 = scmp.eq.s32.totalorder %s21, 1
      %p84 = por %p82, %p83
      %p86 = scmp.ne.s32.totalorder %s69, %s85
      %p87 = scmp.eq.s32.totalorder %s21, 0
      %p88 = por %p86, %p87
      %s89 = ssub.s32 %s22, %s34
      %s90 = ssub.s32 %s23, %s30
      %s91 = sor.u32 %s89, %s90
      %p92 = scmp.eq.s32.totalorder %s91, 0
      %s94 = sadd.s32 %s93, 1
      %s95 = scalar_select %p92, %s93, %s94
      %p98 = pneg %p92
      %p99 = scmp.eq.s32.totalorder %s15, 1
      %p100 = por %p98, %p99
      %p101 = scmp.ne.s32.totalorder %s93, %s96
      %p102 = scmp.eq.s32.totalorder %s15, 0
      %p103 = por %p101, %p102
      %p104 = scmp.ne.s32.totalorder %s93, %s96
      %p105 = scmp.eq.s32.totalorder %s20, 1
      %p106 = por %p104, %p105
      %p107 = scmp.ne.s32.totalorder %s96, %s97
      %p108 = scmp.eq.s32.totalorder %s20, 0
      %p109 = por %p107, %p108
      %p110 = scmp.ne.s32.totalorder %s96, %s97
      %p111 = scmp.eq.s32.totalorder %s21, 1
      %p112 = por %p110, %p111
      %p114 = scmp.ne.s32.totalorder %s97, %s113
      %p115 = scmp.eq.s32.totalorder %s21, 0
      %p116 = por %p114, %p115
      %s117 = ssub.s32 %s22, %s34
      %s118 = ssub.s32 %s23, %s30
      %s119 = sor.u32 %s117, %s118
      %p120 = scmp.eq.s32.totalorder %s119, 0
      %s122 = sadd.s32 %s121, 1
      %s123 = scalar_select %p120, %s121, %s122
      %p126 = pneg %p120
      %p127 = scmp.eq.s32.totalorder %s15, 1
      %p128 = por %p126, %p127
      %p129 = scmp.ne.s32.totalorder %s121, %s124
      %p130 = scmp.eq.s32.totalorder %s15, 0
      %p131 = por %p129, %p130
      %p132 = scmp.ne.s32.totalorder %s121, %s124
      %p133 = scmp.eq.s32.totalorder %s20, 1
      %p134 = por %p132, %p133
      %p135 = scmp.ne.s32.totalorder %s124, %s125
      %p136 = scmp.eq.s32.totalorder %s20, 0
      %p137 = por %p135, %p136
      %p138 = scmp.ne.s32.totalorder %s124, %s125
      %p139 = scmp.eq.s32.totalorder %s21, 1
      %p140 = por %p138, %p139
      %p142 = scmp.ne.s32.totalorder %s125, %s141
      %p143 = scmp.eq.s32.totalorder %s21, 0
      %p144 = por %p142, %p143
      %s145 = ssub.s32 %s22, %s34
      %s146 = ssub.s32 %s23, %s30
      %s147 = sor.u32 %s145, %s146
      %p148 = scmp.eq.s32.totalorder %s147, 0
      %s150 = sadd.s32 %s149, 1
      %s151 = scalar_select %p148, %s149, %s150
      %p154 = pneg %p148
      %p155 = scmp.eq.s32.totalorder %s15, 1
      %p156 = por %p154, %p155
      %p157 = scmp.ne.s32.totalorder %s149, %s152
      %p158 = scmp.eq.s32.totalorder %s15, 0
      %p159 = por %p157, %p158
      %p160 = scmp.ne.s32.totalorder %s149, %s152
      %p161 = scmp.eq.s32.totalorder %s20, 1
      %p162 = por %p160, %p161
      %p163 = scmp.ne.s32.totalorder %s152, %s153
      %p164 = scmp.eq.s32.totalorder %s20, 0
      %p165 = por %p163, %p164
      %p166 = scmp.ne.s32.totalorder %s152, %s153
      %p167 = scmp.eq.s32.totalorder %s21, 1
      %p168 = por %p166, %p167
      %p170 = scmp.ne.s32.totalorder %s153, %s169
      %p171 = scmp.eq.s32.totalorder %s21, 0
      %p172 = por %p170, %p171
      %s173 = ssub.s32 %s22, %s34
      %s174 = ssub.s32 %s23, %s30
      %s175 = sor.u32 %s173, %s174
      %p176 = scmp.eq.s32.totalorder %s175, 0
      %s178 = sadd.s32 %s177, 1
      %s179 = scalar_select %p176, %s177, %s178
      %p182 = pneg %p176
      %p183 = scmp.eq.s32.totalorder %s15, 1
      %p184 = por %p182, %p183
      %p185 = scmp.ne.s32.totalorder %s177, %s180
      %p186 = scmp.eq.s32.totalorder %s15, 0
      %p187 = por %p185, %p186
      %p188 = scmp.ne.s32.totalorder %s177, %s180
      %p189 = scmp.eq.s32.totalorder %s20, 1
      %p190 = por %p188, %p189
      %p191 = scmp.ne.s32.totalorder %s180, %s181
      %p192 = scmp.eq.s32.totalorder %s20, 0
      %p193 = por %p191, %p192
      %p194 = scmp.ne.s32.totalorder %s180, %s181
      %p195 = scmp.eq.s32.totalorder %s21, 1
      %p196 = por %p194, %p195
      %p198 = scmp.ne.s32.totalorder %s181, %s197
      %p199 = scmp.eq.s32.totalorder %s21, 0
      %p200 = por %p198, %p199
      %p201 = scmp.le.s32.totalorder 1, %s15
      %p202 = scmp.lt.s32.totalorder %s15, 3
      %p203 = pnand %p201, %p202
      %p204 = pneg %p203
      // Predicated region
      $region9: #{tpu_custom_call.1} parent=5 // pred_check
        _
      $region10: #{tpu_custom_call.1} parent=5 // pred_check_branch
        %206 = sbr.rel (%p203) target = $region12
      $region11: #{tpu_custom_call.1} parent=5 // pred_region
        %s207 = ssub.s32 %s15, 1
      $region12: #{tpu_custom_call.1} parent=5 // pred_fallthru
        _
      %p208 = scmp.lt.s32.totalorder %s15, 2
      // Predicated region
      $region13: #{tpu_custom_call.1} parent=5 // pred_check
        %p209 = pneg %p208
      $region14: #{tpu_custom_call.1} parent=5 // pred_check_branch
        %211 = sbr.rel (%p209) target = $region16
      $region15: #{tpu_custom_call.1} parent=5 // pred_region
        // Predicated region
        $region17: #{tpu_custom_call.1} parent=15 // pred_check
          %p212 = pneg %p49
        $region18: #{tpu_custom_call.1} parent=15 // pred_check_branch
          %214 = sbr.rel (%p212) target = $region20
        $region19: #{tpu_custom_call.1} parent=15 // pred_region
          %s215 = smul.u32 3, %s23
          %p216 = scmp.lt.s32.totalorder %s22, 1
          %s217 = scalar_select %p216, %s22, 1
          %p218 = scmp.lt.s32.totalorder %s215, 2
          %s219 = scalar_select %p218, %s215, 2
          %s220 = smul.addr %s219, 2
          %s221 = smul.addr %s217, 6
          %s222 = sadd.s32 %s220, %s221
          %s223 = smul.addr %s222, 8
          %s224 = scalar_lea.vmem %s0, %s223
          %s225 = smul.u32 3, %s23
        $region20: #{tpu_custom_call.1} parent=15 // pred_fallthru
          _
        // Predicated region
        $region21: #{tpu_custom_call.1} parent=15 // pred_check
          %p226 = pneg %p75
        $region22: #{tpu_custom_call.1} parent=15 // pred_check_branch
          %228 = sbr.rel (%p226) target = $region24
        $region23: #{tpu_custom_call.1} parent=15 // pred_region
          %p229 = scmp.lt.s32.totalorder %s22, 1
          %s230 = scalar_select %p229, %s22, 1
          %s231 = smul.addr %s230, 4
          %s232 = smul.addr %s231, 8
          %s233 = scalar_lea.vmem %s1, %s232
        $region24: #{tpu_custom_call.1} parent=15 // pred_fallthru
          _
      $region16: #{tpu_custom_call.1} parent=5 // pred_fallthru
        _
      %p234 = scmp.le.s32.totalorder 1, %s15
      %p235 = scmp.lt.s32.totalorder %s15, 3
      %p236 = pnand %p234, %p235
      %p237 = pneg %p236
      // Predicated region
      $region25: #{tpu_custom_call.1} parent=5 // pred_check
        _
      $region26: #{tpu_custom_call.1} parent=5 // pred_check_branch
        %239 = sbr.rel (%p236) target = $region28
      $region27: #{tpu_custom_call.1} parent=5 // pred_region
        %s240 = ssub.s32 %s15, 1
        %s241 = smul.u32 3, %s25
        %p242 = scmp.lt.s32.totalorder %s24, 1
        %s243 = scalar_select %p242, %s24, 1
        %p244 = scmp.lt.s32.totalorder %s241, 2
        %s245 = scalar_select %p244, %s241, 2
        %s246 = smul.addr %s245, 2
        %s247 = smul.addr %s243, 6
        %s248 = sadd.s32 %s246, %s247
        %s249 = smul.addr %s248, 8
        %s250 = scalar_lea.vmem %s0, %s249
        %p251 = pneg %p55
        %p252 = pneg %p52
        %p253 = scmp.lt.s32.totalorder %s24, 1
        %s254 = scalar_select %p253, %s24, 1
        %s255 = smul.addr %s254, 4
        %s256 = smul.addr %s255, 8
        %s257 = scalar_lea.vmem %s1, %s256
        %p258 = pneg %p81
        %p259 = pneg %p78
        %p260 = pneg %p109
        %p261 = pneg %p106
        %p262 = scmp.lt.s32.totalorder %s24, 1
        %s263 = scalar_select %p262, %s24, 1
        %p264 = scmp.lt.s32.totalorder %s25, 0
        %s265 = scalar_select %p264, %s25, 0
        %s266 = sadd.s32 %s265, %s263
        %s267 = smul.addr %s266, 4
        %s268 = scalar_lea.vmem %s2, %s267
        %p269 = pneg %p137
        %p270 = pneg %p134
        %s271 = sand.u32 %s124, 1
        %s272 = scalar_lea.sflag [#allocation3], %s271
        %s273 = sand.u32 %s124, 1
        %s274 = smul.addr %s273, 2
        %s275 = scalar_lea.vmem [#allocation2], %s274
        %p276 = pneg %p165
        %p277 = pneg %p162
        %p278 = scmp.lt.s32.totalorder %s24, 1
        %s279 = scalar_select %p278, %s24, 1
        %p280 = scmp.lt.s32.totalorder %s25, 0
        %s281 = scalar_select %p280, %s25, 0
        %s282 = sadd.s32 %s281, %s279
        %s283 = smul.addr %s282, 4
        %s284 = scalar_lea.vmem %s4, %s283
        %p285 = pneg %p193
        %p286 = pneg %p190
        %s287 = smul.u32 6, %s25
        %p288 = scmp.lt.s32.totalorder %s24, 1
        %s289 = scalar_select %p288, %s24, 1
        %p290 = scmp.lt.s32.totalorder %s287, 5
        %s291 = scalar_select %p290, %s287, 5
        %s292 = smul.addr %s289, 6
        %s293 = sadd.s32 %s291, %s292
        %s294 = smul.addr %s293, 8
        %s295 = scalar_lea.vmem %s5, %s294
        %s296 = smul.u32 3, %s25
        %p297 = scmp.lt.s32.totalorder %s24, 1
        %s298 = scalar_select %p297, %s24, 1
        %p299 = scmp.lt.s32.totalorder %s296, 2
        %s300 = scalar_select %p299, %s296, 2
        %s301 = smul.addr %s300, 2
        %s302 = smul.addr %s298, 6
        %s303 = sadd.s32 %s301, %s302
        %s304 = smul.addr %s303, 8
        %s305 = scalar_lea.vmem %s0, %s304
        %s306 = smul.u32 3, %s25
        %p307 = scmp.lt.s32.totalorder %s24, 1
        %s308 = scalar_select %p307, %s24, 1
        %s309 = smul.addr %s308, 4
        %s310 = smul.addr %s309, 8
        %s311 = scalar_lea.vmem %s1, %s310
        %p312 = scmp.lt.s32.totalorder %s24, 1
        %s313 = scalar_select %p312, %s24, 1
        %p314 = scmp.lt.s32.totalorder %s25, 0
        %s315 = scalar_select %p314, %s25, 0
        %s316 = sadd.s32 %s315, %s313
        %s317 = smul.addr %s316, 4
        %s318 = scalar_lea.vmem %s2, %s317
        %p319 = scmp.lt.s32.totalorder %s24, 1
        %s320 = scalar_select %p319, %s24, 1
        %p321 = scmp.lt.s32.totalorder %s25, 0
        %s322 = scalar_select %p321, %s25, 0
        %s323 = sadd.s32 %s322, %s320
        %s324 = smul.addr %s323, 4
        %s325 = scalar_lea.vmem %s4, %s324
        %s326 = smul.u32 6, %s25
        %p327 = scmp.lt.s32.totalorder %s24, 1
        %s328 = scalar_select %p327, %s24, 1
        %p329 = scmp.lt.s32.totalorder %s326, 5
        %s330 = scalar_select %p329, %s326, 5
        %s331 = smul.addr %s328, 6
        %s332 = sadd.s32 %s330, %s331
        %s333 = smul.addr %s332, 8
        %s334 = scalar_lea.vmem %s5, %s333
        %s335 = smul.u32 6, %s25
        %v336 = vld [vmem:[%s305] sm:$0xff]
        %v337 = vld [vmem:[%s305 + $0x8] sm:$0xff]
        %v338 = vld [vmem:[%s305 + $0x10] sm:$0xff]
        %v339 = vld [vmem:[%s305 + $0x18] sm:$0xff]
        %v340 = vld [vmem:[%s305 + $0x20] sm:$0xff]
        %v341 = vld [vmem:[%s305 + $0x28] sm:$0xff]
        %v342 = vld [vmem:[%s311] sm:$0xff]
        %v343 = vld [vmem:[%s311 + $0x8] sm:$0xff]
        %v344 = vld [vmem:[%s311 + $0x10] sm:$0xff]
        %v345 = vld [vmem:[%s311 + $0x18] sm:$0xff]
        %vm346 = vcmask 64512
        %v347 = vsel %vm346, %v336, 0.0
        %v348 = vsel %vm346, %v337, 0.0
        %v349 = vadd.f32 %v347, %v348
        %v350 = vrot.slane %v349, 4
        %v351 = vadd.f32 %v349, %v350
        %v352 = vrot.slane %v351, 2
        %v353 = vadd.f32 %v351, %v352
        %v354 = vrot.slane %v353, 1
        %v355 = vadd.f32 %v353, %v354
        %v356 = vsel %vm346, %v338, 0.0
        %v357 = vsel %vm346, %v339, 0.0
        %v358 = vadd.f32 %v356, %v357
        %v359 = vrot.slane %v358, 4
        %v360 = vadd.f32 %v358, %v359
        %v361 = vrot.slane %v360, 2
        %v362 = vadd.f32 %v360, %v361
        %v363 = vrot.slane %v362, 1
        %v364 = vadd.f32 %v362, %v363
        %v365 = vsel %vm346, %v340, 0.0
        %v366 = vsel %vm346, %v341, 0.0
        %v367 = vadd.f32 %v365, %v366
        %v368 = vrot.slane %v367, 4
        %v369 = vadd.f32 %v367, %v368
        %v370 = vrot.slane %v369, 2
        %v371 = vadd.f32 %v369, %v370
        %v372 = vrot.slane %v371, 1
        %v373 = vadd.f32 %v371, %v372
        %v374 = vrcp.pop 16.0
        %v375 = vmul.f32 %v355, %v374
        %v376 = vmul.f32 %v364, %v374
        %v377 = vmul.f32 %v373, %v374
        %v378 = vsel %vm346, %v342, 0.0
        %v379 = vsel %vm346, %v343, 0.0
        %v380 = vadd.f32 %v378, %v379
        %v381 = vrot.slane %v380, 4
        %v382 = vadd.f32 %v380, %v381
        %v383 = vrot.slane %v382, 2
        %v384 = vadd.f32 %v382, %v383
        %v385 = vrot.slane %v384, 1
        %v386 = vadd.f32 %v384, %v385
        %v387 = vsel %vm346, %v344, 0.0
        %v388 = vsel %vm346, %v345, 0.0
        %v389 = vadd.f32 %v387, %v388
        %v390 = vrot.slane %v389, 4
        %v391 = vadd.f32 %v389, %v390
        %v392 = vrot.slane %v391, 2
        %v393 = vadd.f32 %v391, %v392
        %v394 = vrot.slane %v393, 1
        %v395 = vadd.f32 %v393, %v394
        %v396 = vmul.f32 %v386, %v374
        %v397 = vmul.f32 %v395, %v374
        %vm400 = vcmask 1041409
        %v401 = vsel %vm400, %v397, %v396
        %v402 = vsel %vm346, %v401, 0
        %v405 = vsel %vm346, %v336, 0
        %v408 = vsel %vm346, %v337, 0
        %v411 = vsel %vm346, %v338, 0
        %v414 = vsel %vm346, %v339, 0
        %v417 = vsel %vm346, %v340, 0
        %v420 = vsel %vm346, %v341, 0
        %422 = vmatprep.subr.mxu0 0.0
        %423 = vmatpush1.xpose.msra.mxu0 %v405
        %424 = vmatprep.subr.mxu0 0.0
        %425 = vmatpush1.xpose.msra.mxu0 %v408
        %426 = vmatprep.subr.mxu0 0.0
        %427 = vmatpush1.xpose.msra.mxu0 %v411
        %428 = vmatprep.subr.mxu0 0.0
        %429 = vmatpush1.xpose.msra.mxu0 %v414
        %430 = vmatprep.subr.mxu0 0.0
        %431 = vmatpush1.xpose.msra.mxu0 %v417
        %432 = vmatprep.subr.mxu0 0.0
        %433 = vmatpush1.xpose.msra.mxu0 %v420
        %434 = vmatprep.subr.mxu0 0.0
        %435 = vmatpush1.xpose.msra.mxu0 0.0
        %436 = vmatprep.subr.mxu0 0.0
        %437 = vmatpush1.xpose.msra.mxu0 0.0
        %438 = vmatprep.subr.mxu0 0.0
        %439 = vmatpush1.xpose.msra.mxu0 0.0
        %440 = vmatprep.subr.mxu0 0.0
        %441 = vmatpush1.xpose.msra.mxu0 0.0
        %442 = vmatprep.subr.mxu0 0.0
        %443 = vmatpush1.xpose.msra.mxu0 0.0
        %444 = vmatprep.subr.mxu0 0.0
        %445 = vmatpush1.xpose.msra.mxu0 0.0
        %446 = vmatprep.subr.mxu0 0.0
        %447 = vmatpush1.xpose.msra.mxu0 0.0
        %448 = vmatprep.subr.mxu0 0.0
        %449 = vmatpush1.xpose.msra.mxu0 0.0
        %450 = vmatprep.subr.mxu0 0.0
        %451 = vmatpush1.xpose.msra.mxu0 0.0
        %452 = vmatprep.subr.mxu0 0.0
        %453 = vmatpush1.xpose.msra.mxu0 0.0
        %454 = vmatprep.subr.mxu0 0.0
        %455 = vmatpush1.xpose.msra.mxu0 0.0
        %456 = vmatprep.subr.mxu0 0.0
        %457 = vmatpush1.xpose.msra.mxu0 0.0
        %458 = vmatprep.subr.mxu0 0.0
        %459 = vmatpush1.xpose.msra.mxu0 0.0
        %460 = vmatprep.subr.mxu0 0.0
        %461 = vmatpush1.xpose.msra.mxu0 0.0
        %462 = vmatprep.subr.mxu0 0.0
        %463 = vmatpush1.xpose.msra.mxu0 0.0
        %464 = vmatprep.subr.mxu0 0.0
        %465 = vmatpush1.xpose.msra.mxu0 0.0
        %466 = vmatprep.subr.mxu0 0.0
        %467 = vmatpush1.xpose.msra.mxu0 0.0
        %468 = vmatprep.subr.mxu0 0.0
        %469 = vmatpush1.xpose.msra.mxu0 0.0
        %470 = vmatprep.subr.mxu0 0.0
        %471 = vmatpush1.xpose.msra.mxu0 0.0
        %472 = vmatprep.subr.mxu0 0.0
        %473 = vmatpush1.xpose.msra.mxu0 0.0
        %474 = vmatprep.subr.mxu0 0.0
        %475 = vmatpush1.xpose.msra.mxu0 0.0
        %476 = vmatprep.subr.mxu0 0.0
        %477 = vmatpush1.xpose.msra.mxu0 0.0
        %478 = vmatprep.subr.mxu0 0.0
        %479 = vmatpush1.xpose.msra.mxu0 0.0
        %480 = vmatprep.subr.mxu0 0.0
        %481 = vmatpush1.xpose.msra.mxu0 0.0
        %482 = vmatprep.subr.mxu0 0.0
        %483 = vmatpush1.xpose.msra.mxu0 0.0
        %484 = vmatprep.subr.mxu0 0.0
        %485 = vmatpush1.xpose.msra.mxu0 0.0
        %486 = vmatprep.mubr.f32.mxu0 0.0
        %487 = vmatmul.mubr.f32.gmra.mrb[0].mxu0 %v402
        %v488 = vpop.f32.mrb[0].mxu0
        %v489 = vadd.f32 0.0, %v488
        %v490 = vpop.f32.mrb[0].mxu0
        %491 = vdwg.mxu0
        %v495 = vsel %vm400, %v376, %v375
        %vm496 = vcmask 1042434
        %v497 = vsel %vm496, %v377, %v495
        %v498 = vsel %vm346, %v497, 0
        %v501 = vsel %vm346, %v342, 0
        %v504 = vsel %vm346, %v343, 0
        %v507 = vsel %vm346, %v344, 0
        %v510 = vsel %vm346, %v345, 0
        %512 = vmatprep.subr.mxu0 0.0
        %513 = vmatpush1.xpose.msra.mxu0 %v501
        %514 = vmatprep.subr.mxu0 0.0
        %515 = vmatpush1.xpose.msra.mxu0 %v504
        %516 = vmatprep.subr.mxu0 0.0
        %517 = vmatpush1.xpose.msra.mxu0 %v507
        %518 = vmatprep.subr.mxu0 0.0
        %519 = vmatpush1.xpose.msra.mxu0 %v510
        %520 = vmatprep.subr.mxu0 0.0
        %521 = vmatpush1.xpose.msra.mxu0 0.0
        %522 = vmatprep.subr.mxu0 0.0
        %523 = vmatpush1.xpose.msra.mxu0 0.0
        %524 = vmatprep.subr.mxu0 0.0
        %525 = vmatpush1.xpose.msra.mxu0 0.0
        %526 = vmatprep.subr.mxu0 0.0
        %527 = vmatpush1.xpose.msra.mxu0 0.0
        %528 = vmatprep.subr.mxu0 0.0
        %529 = vmatpush1.xpose.msra.mxu0 0.0
        %530 = vmatprep.subr.mxu0 0.0
        %531 = vmatpush1.xpose.msra.mxu0 0.0
        %532 = vmatprep.subr.mxu0 0.0
        %533 = vmatpush1.xpose.msra.mxu0 0.0
        %534 = vmatprep.subr.mxu0 0.0
        %535 = vmatpush1.xpose.msra.mxu0 0.0
        %536 = vmatprep.subr.mxu0 0.0
        %537 = vmatpush1.xpose.msra.mxu0 0.0
        %538 = vmatprep.subr.mxu0 0.0
        %539 = vmatpush1.xpose.msra.mxu0 0.0
        %540 = vmatprep.subr.mxu0 0.0
        %541 = vmatpush1.xpose.msra.mxu0 0.0
        %542 = vmatprep.subr.mxu0 0.0
        %543 = vmatpush1.xpose.msra.mxu0 0.0
        %544 = vmatprep.subr.mxu0 0.0
        %545 = vmatpush1.xpose.msra.mxu0 0.0
        %546 = vmatprep.subr.mxu0 0.0
        %547 = vmatpush1.xpose.msra.mxu0 0.0
        %548 = vmatprep.subr.mxu0 0.0
        %549 = vmatpush1.xpose.msra.mxu0 0.0
        %550 = vmatprep.subr.mxu0 0.0
        %551 = vmatpush1.xpose.msra.mxu0 0.0
        %552 = vmatprep.subr.mxu0 0.0
        %553 = vmatpush1.xpose.msra.mxu0 0.0
        %554 = vmatprep.subr.mxu0 0.0
        %555 = vmatpush1.xpose.msra.mxu0 0.0
        %556 = vmatprep.subr.mxu0 0.0
        %557 = vmatpush1.xpose.msra.mxu0 0.0
        %558 = vmatprep.subr.mxu0 0.0
        %559 = vmatpush1.xpose.msra.mxu0 0.0
        %560 = vmatprep.subr.mxu0 0.0
        %561 = vmatpush1.xpose.msra.mxu0 0.0
        %562 = vmatprep.subr.mxu0 0.0
        %563 = vmatpush1.xpose.msra.mxu0 0.0
        %564 = vmatprep.subr.mxu0 0.0
        %565 = vmatpush1.xpose.msra.mxu0 0.0
        %566 = vmatprep.subr.mxu0 0.0
        %567 = vmatpush1.xpose.msra.mxu0 0.0
        %568 = vmatprep.subr.mxu0 0.0
        %569 = vmatpush1.xpose.msra.mxu0 0.0
        %570 = vmatprep.subr.mxu0 0.0
        %571 = vmatpush1.xpose.msra.mxu0 0.0
        %572 = vmatprep.subr.mxu0 0.0
        %573 = vmatpush1.xpose.msra.mxu0 0.0
        %574 = vmatprep.subr.mxu0 0.0
        %575 = vmatpush1.xpose.msra.mxu0 0.0
        %576 = vmatprep.mubr.f32.mxu0 0.0
        %577 = vmatmul.mubr.f32.gmra.mrb[0].mxu0 %v498
        %v578 = vpop.f32.mrb[0].mxu0
        %v579 = vadd.f32 0.0, %v578
        %v580 = vpop.f32.mrb[0].mxu0
        %581 = vdwg.mxu0
        %v582 = vmax.f32 %v489, 0.0
        %v583 = vadd.f32 %v582, 0.001
        %vm584 = vcmask 386048
        %585 = vst.msk [vmem:[%s275] sm:$0x3] %vm584, %v583
        %v586 = vmax.f32 %v579, 0.0
        %v587 = vadd.f32 %v586, 0.001
        %vm588 = vcmask 256000
        %589 = vst.msk [vmem:[%s325] sm:$0x7] %vm588, %v587
        %590 = vadd.xlane.f32.xlu0 %v347
        %v591 = vpop.xlane.xlu0 %590
        %592 = vadd.xlane.f32.xlu0 %v348
        %v593 = vpop.xlane.xlu0 %592
        %594 = vadd.xlane.f32.xlu0 %v356
        %v595 = vpop.xlane.xlu0 %594
        %596 = vadd.xlane.f32.xlu0 %v357
        %v597 = vpop.xlane.xlu0 %596
        %598 = vadd.xlane.f32.xlu0 %v365
        %v599 = vpop.xlane.xlu0 %598
        %600 = vadd.xlane.f32.xlu0 %v366
        %v601 = vpop.xlane.xlu0 %600
        %v602 = vrcp.pop 8.0
        %v603 = vmul.f32 %v591, %v602
        %v604 = vmul.f32 %v593, %v602
        %v605 = vmul.f32 %v595, %v602
        %v606 = vmul.f32 %v597, %v602
        %v607 = vmul.f32 %v599, %v602
        %v608 = vmul.f32 %v601, %v602
        %v609 = vsub.f32 %v336, %v603
        %v610 = vsub.f32 %v337, %v604
        %v611 = vsub.f32 %v338, %v605
        %v612 = vsub.f32 %v339, %v606
        %v613 = vsub.f32 %v340, %v607
        %v614 = vsub.f32 %v341, %v608
        %615 = vadd.xlane.f32.xlu0 %v378
        %v616 = vpop.xlane.xlu0 %615
        %617 = vadd.xlane.f32.xlu0 %v379
        %v618 = vpop.xlane.xlu0 %617
        %619 = vadd.xlane.f32.xlu0 %v387
        %v620 = vpop.xlane.xlu0 %619
        %621 = vadd.xlane.f32.xlu0 %v388
        %v622 = vpop.xlane.xlu0 %621
        %v623 = vmul.f32 %v616, %v602
        %v624 = vmul.f32 %v618, %v602
        %v625 = vmul.f32 %v620, %v602
        %v626 = vmul.f32 %v622, %v602
        %v627 = vsub.f32 %v342, %v623
        %v628 = vsub.f32 %v343, %v624
        %v629 = vsub.f32 %v344, %v625
        %v630 = vsub.f32 %v345, %v626
        %v631 = vmul.f32 %v609, %v609
        %v632 = vmul.f32 %v610, %v610
        %v633 = vmul.f32 %v611, %v611
        %v634 = vmul.f32 %v612, %v612
        %v635 = vmul.f32 %v613, %v613
        %v636 = vmul.f32 %v614, %v614
        %v637 = vsel %vm346, %v631, 0.0
        %638 = vadd.xlane.f32.xlu0 %v637
        %v639 = vpop.xlane.xlu0 %638
        %v640 = vsel %vm346, %v632, 0.0
        %641 = vadd.xlane.f32.xlu0 %v640
        %v642 = vpop.xlane.xlu0 %641
        %v643 = vsel %vm346, %v633, 0.0
        %644 = vadd.xlane.f32.xlu0 %v643
        %v645 = vpop.xlane.xlu0 %644
        %v646 = vsel %vm346, %v634, 0.0
        %647 = vadd.xlane.f32.xlu0 %v646
        %v648 = vpop.xlane.xlu0 %647
        %v649 = vsel %vm346, %v635, 0.0
        %650 = vadd.xlane.f32.xlu0 %v649
        %v651 = vpop.xlane.xlu0 %650
        %v652 = vsel %vm346, %v636, 0.0
        %653 = vadd.xlane.f32.xlu0 %v652
        %v654 = vpop.xlane.xlu0 %653
        %v655 = vrsqrt.pop %v639
        %v656 = vmul.f32 %v639, %v655
        %vm657 = vcmp.eq.f32.partialorder %v639, inf
        %v658 = vsel %vm657, %v639, %v656
        %vm659 = vcmp.eq.f32.partialorder %v639, 0.0
        %v660 = vand.u32 %v639, 2147483648
        %v661 = vsel %vm659, %v660, %v658
        %v662 = vrsqrt.pop %v642
        %v663 = vmul.f32 %v642, %v662
        %vm664 = vcmp.eq.f32.partialorder %v642, inf
        %v665 = vsel %vm664, %v642, %v663
        %vm666 = vcmp.eq.f32.partialorder %v642, 0.0
        %v667 = vand.u32 %v642, 2147483648
        %v668 = vsel %vm666, %v667, %v665
        %v669 = vrsqrt.pop %v645
        %v670 = vmul.f32 %v645, %v669
        %vm671 = vcmp.eq.f32.partialorder %v645, inf
        %v672 = vsel %vm671, %v645, %v670
        %vm673 = vcmp.eq.f32.partialorder %v645, 0.0
        %v674 = vand.u32 %v645, 2147483648
        %v675 = vsel %vm673, %v674, %v672
        %v676 = vrsqrt.pop %v648
        %v677 = vmul.f32 %v648, %v676
        %vm678 = vcmp.eq.f32.partialorder %v648, inf
        %v679 = vsel %vm678, %v648, %v677
        %vm680 = vcmp.eq.f32.partialorder %v648, 0.0
        %v681 = vand.u32 %v648, 2147483648
        %v682 = vsel %vm680, %v681, %v679
        %v683 = vrsqrt.pop %v651
        %v684 = vmul.f32 %v651, %v683
        %vm685 = vcmp.eq.f32.partialorder %v651, inf
        %v686 = vsel %vm685, %v651, %v684
        %vm687 = vcmp.eq.f32.partialorder %v651, 0.0
        %v688 = vand.u32 %v651, 2147483648
        %v689 = vsel %vm687, %v688, %v686
        %v690 = vrsqrt.pop %v654
        %v691 = vmul.f32 %v654, %v690
        %vm692 = vcmp.eq.f32.partialorder %v654, inf
        %v693 = vsel %vm692, %v654, %v691
        %vm694 = vcmp.eq.f32.partialorder %v654, 0.0
        %v695 = vand.u32 %v654, 2147483648
        %v696 = vsel %vm694, %v695, %v693
        %v697 = vmax.f32 %v661, 1e-08
        %v698 = vmax.f32 %v668, 1e-08
        %v699 = vmax.f32 %v675, 1e-08
        %v700 = vmax.f32 %v682, 1e-08
        %v701 = vmax.f32 %v689, 1e-08
        %v702 = vmax.f32 %v696, 1e-08
        %v703 = vrcp.pop %v697
        %v704 = vmul.f32 %v609, %v703
        %v705 = vrcp.pop %v698
        %v706 = vmul.f32 %v610, %v705
        %v707 = vrcp.pop %v699
        %v708 = vmul.f32 %v611, %v707
        %v709 = vrcp.pop %v700
        %v710 = vmul.f32 %v612, %v709
        %v711 = vrcp.pop %v701
        %v712 = vmul.f32 %v613, %v711
        %v713 = vrcp.pop %v702
        %v714 = vmul.f32 %v614, %v713
        %v715 = vmul.f32 %v627, %v627
        %v716 = vmul.f32 %v628, %v628
        %v717 = vmul.f32 %v629, %v629
        %v718 = vmul.f32 %v630, %v630
        %v719 = vsel %vm346, %v715, 0.0
        %720 = vadd.xlane.f32.xlu0 %v719
        %v721 = vpop.xlane.xlu0 %720
        %v722 = vsel %vm346, %v716, 0.0
        %723 = vadd.xlane.f32.xlu0 %v722
        %v724 = vpop.xlane.xlu0 %723
        %v725 = vsel %vm346, %v717, 0.0
        %726 = vadd.xlane.f32.xlu0 %v725
        %v727 = vpop.xlane.xlu0 %726
        %v728 = vsel %vm346, %v718, 0.0
        %729 = vadd.xlane.f32.xlu0 %v728
        %v730 = vpop.xlane.xlu0 %729
        %v731 = vrsqrt.pop %v721
        %v732 = vmul.f32 %v721, %v731
        %vm733 = vcmp.eq.f32.partialorder %v721, inf
        %v734 = vsel %vm733, %v721, %v732
        %vm735 = vcmp.eq.f32.partialorder %v721, 0.0
        %v736 = vand.u32 %v721, 2147483648
        %v737 = vsel %vm735, %v736, %v734
        %v738 = vrsqrt.pop %v724
        %v739 = vmul.f32 %v724, %v738
        %vm740 = vcmp.eq.f32.partialorder %v724, inf
        %v741 = vsel %vm740, %v724, %v739
        %vm742 = vcmp.eq.f32.partialorder %v724, 0.0
        %v743 = vand.u32 %v724, 2147483648
        %v744 = vsel %vm742, %v743, %v741
        %v745 = vrsqrt.pop %v727
        %v746 = vmul.f32 %v727, %v745
        %vm747 = vcmp.eq.f32.partialorder %v727, inf
        %v748 = vsel %vm747, %v727, %v746
        %vm749 = vcmp.eq.f32.partialorder %v727, 0.0
        %v750 = vand.u32 %v727, 2147483648
        %v751 = vsel %vm749, %v750, %v748
        %v752 = vrsqrt.pop %v730
        %v753 = vmul.f32 %v730, %v752
        %vm754 = vcmp.eq.f32.partialorder %v730, inf
        %v755 = vsel %vm754, %v730, %v753
        %vm756 = vcmp.eq.f32.partialorder %v730, 0.0
        %v757 = vand.u32 %v730, 2147483648
        %v758 = vsel %vm756, %v757, %v755
        %v759 = vmax.f32 %v737, 1e-08
        %v760 = vmax.f32 %v744, 1e-08
        %v761 = vmax.f32 %v751, 1e-08
        %v762 = vmax.f32 %v758, 1e-08
        %v763 = vrcp.pop %v759
        %v764 = vmul.f32 %v627, %v763
        %v765 = vrcp.pop %v760
        %v766 = vmul.f32 %v628, %v765
        %v767 = vrcp.pop %v761
        %v768 = vmul.f32 %v629, %v767
        %v769 = vrcp.pop %v762
        %v770 = vmul.f32 %v630, %v769
        %v772 = vsel %vm346, %v704, 0
        %v775 = vsel %vm346, %v706, 0
        %v778 = vsel %vm346, %v708, 0
        %v781 = vsel %vm346, %v710, 0
        %v784 = vsel %vm346, %v712, 0
        %v787 = vsel %vm346, %v714, 0
        %v790 = vsel %vm346, %v764, 0
        %v793 = vsel %vm346, %v766, 0
        %v796 = vsel %vm346, %v768, 0
        %v799 = vsel %vm346, %v770, 0
        %801 = vmatprep.subr.mxu0 0.0
        %802 = vmatpush1.xpose.msra.mxu0 %v790
        %803 = vmatprep.subr.mxu0 0.0
        %804 = vmatpush1.xpose.msra.mxu0 %v793
        %805 = vmatprep.subr.mxu0 0.0
        %806 = vmatpush1.xpose.msra.mxu0 %v796
        %807 = vmatprep.subr.mxu0 0.0
        %808 = vmatpush1.xpose.msra.mxu0 %v799
        %809 = vmatprep.subr.mxu0 0.0
        %810 = vmatpush1.xpose.msra.mxu0 0.0
        %811 = vmatprep.subr.mxu0 0.0
        %812 = vmatpush1.xpose.msra.mxu0 0.0
        %813 = vmatprep.subr.mxu0 0.0
        %814 = vmatpush1.xpose.msra.mxu0 0.0
        %815 = vmatprep.subr.mxu0 0.0
        %816 = vmatpush1.xpose.msra.mxu0 0.0
        %817 = vmatprep.subr.mxu0 0.0
        %818 = vmatpush1.xpose.msra.mxu0 0.0
        %819 = vmatprep.subr.mxu0 0.0
        %820 = vmatpush1.xpose.msra.mxu0 0.0
        %821 = vmatprep.subr.mxu0 0.0
        %822 = vmatpush1.xpose.msra.mxu0 0.0
        %823 = vmatprep.subr.mxu0 0.0
        %824 = vmatpush1.xpose.msra.mxu0 0.0
        %825 = vmatprep.subr.mxu0 0.0
        %826 = vmatpush1.xpose.msra.mxu0 0.0
        %827 = vmatprep.subr.mxu0 0.0
        %828 = vmatpush1.xpose.msra.mxu0 0.0
        %829 = vmatprep.subr.mxu0 0.0
        %830 = vmatpush1.xpose.msra.mxu0 0.0
        %831 = vmatprep.subr.mxu0 0.0
        %832 = vmatpush1.xpose.msra.mxu0 0.0
        %833 = vmatprep.subr.mxu0 0.0
        %834 = vmatpush1.xpose.msra.mxu0 0.0
        %835 = vmatprep.subr.mxu0 0.0
        %836 = vmatpush1.xpose.msra.mxu0 0.0
        %837 = vmatprep.subr.mxu0 0.0
        %838 = vmatpush1.xpose.msra.mxu0 0.0
        %839 = vmatprep.subr.mxu0 0.0
        %840 = vmatpush1.xpose.msra.mxu0 0.0
        %841 = vmatprep.subr.mxu0 0.0
        %842 = vmatpush1.xpose.msra.mxu0 0.0
        %843 = vmatprep.subr.mxu0 0.0
        %844 = vmatpush1.xpose.msra.mxu0 0.0
        %845 = vmatprep.subr.mxu0 0.0
        %846 = vmatpush1.xpose.msra.mxu0 0.0
        %847 = vmatprep.subr.mxu0 0.0
        %848 = vmatpush1.xpose.msra.mxu0 0.0
        %849 = vmatprep.subr.mxu0 0.0
        %850 = vmatpush1.xpose.msra.mxu0 0.0
        %851 = vmatprep.subr.mxu0 0.0
        %852 = vmatpush1.xpose.msra.mxu0 0.0
        %853 = vmatprep.subr.mxu0 0.0
        %854 = vmatpush1.xpose.msra.mxu0 0.0
        %855 = vmatprep.subr.mxu0 0.0
        %856 = vmatpush1.xpose.msra.mxu0 0.0
        %857 = vmatprep.subr.mxu0 0.0
        %858 = vmatpush1.xpose.msra.mxu0 0.0
        %859 = vmatprep.subr.mxu0 0.0
        %860 = vmatpush1.xpose.msra.mxu0 0.0
        %861 = vmatprep.subr.mxu0 0.0
        %862 = vmatpush1.xpose.msra.mxu0 0.0
        %863 = vmatprep.subr.mxu0 0.0
        %864 = vmatpush1.xpose.msra.mxu0 0.0
        %865 = vmatprep.mubr.f32.mxu0 0.0
        %866 = vmatmul.mubr.f32.gmra.mrb[0].mxu0 %v772
        %v867 = vpop.f32.mrb[0].mxu0
        %v868 = vadd.f32 0.0, %v867
        %v869 = vpop.f32.mrb[0].mxu0
        %870 = vmatprep.mubr.f32.mxu0 0.0
        %871 = vmatmul.mubr.f32.gmra.mrb[0].mxu0 %v775
        %v872 = vpop.f32.mrb[0].mxu0
        %v873 = vadd.f32 0.0, %v872
        %v874 = vpop.f32.mrb[0].mxu0
        %875 = vmatprep.mubr.f32.mxu0 0.0
        %876 = vmatmul.mubr.f32.gmra.mrb[0].mxu0 %v778
        %v877 = vpop.f32.mrb[0].mxu0
        %v878 = vadd.f32 0.0, %v877
        %v879 = vpop.f32.mrb[0].mxu0
        %880 = vmatprep.mubr.f32.mxu0 0.0
        %881 = vmatmul.mubr.f32.gmra.mrb[0].mxu0 %v781
        %v882 = vpop.f32.mrb[0].mxu0
        %v883 = vadd.f32 0.0, %v882
        %v884 = vpop.f32.mrb[0].mxu0
        %885 = vmatprep.mubr.f32.mxu0 0.0
        %886 = vmatmul.mubr.f32.gmra.mrb[0].mxu0 %v784
        %v887 = vpop.f32.mrb[0].mxu0
        %v888 = vadd.f32 0.0, %v887
        %v889 = vpop.f32.mrb[0].mxu0
        %890 = vmatprep.mubr.f32.mxu0 0.0
        %891 = vmatmul.mubr.f32.gmra.mrb[0].mxu0 %v787
        %v892 = vpop.f32.mrb[0].mxu0
        %v893 = vadd.f32 0.0, %v892
        %v894 = vpop.f32.mrb[0].mxu0
        %895 = vdwg.mxu0
        %vm896 = vcmask 261120
        %897 = vst.msk [vmem:[%s334] sm:$0xff] %vm896, %v868
        %898 = vst.msk [vmem:[%s334 + $0x8] sm:$0xff] %vm896, %v873
        %899 = vst.msk [vmem:[%s334 + $0x10] sm:$0xff] %vm896, %v878
        %900 = vst.msk [vmem:[%s334 + $0x18] sm:$0xff] %vm896, %v883
        %901 = vst.msk [vmem:[%s334 + $0x20] sm:$0xff] %vm896, %v888
        %902 = vst.msk [vmem:[%s334 + $0x28] sm:$0xff] %vm896, %v893
        %v903 = vsel %vm346, %v704, 0.0
        %v904 = vsel %vm346, %v706, 0.0
        %v905 = vadd.f32 %v903, %v904
        %v906 = vrot.slane %v905, 4
        %v907 = vadd.f32 %v905, %v906
        %v908 = vrot.slane %v907, 2
        %v909 = vadd.f32 %v907, %v908
        %v910 = vrot.slane %v909, 1
        %v911 = vadd.f32 %v909, %v910
        %v912 = vsel %vm346, %v708, 0.0
        %v913 = vsel %vm346, %v710, 0.0
        %v914 = vadd.f32 %v912, %v913
        %v915 = vrot.slane %v914, 4
        %v916 = vadd.f32 %v914, %v915
        %v917 = vrot.slane %v916, 2
        %v918 = vadd.f32 %v916, %v917
        %v919 = vrot.slane %v918, 1
        %v920 = vadd.f32 %v918, %v919
        %v921 = vsel %vm346, %v712, 0.0
        %v922 = vsel %vm346, %v714, 0.0
        %v923 = vadd.f32 %v921, %v922
        %v924 = vrot.slane %v923, 4
        %v925 = vadd.f32 %v923, %v924
        %v926 = vrot.slane %v925, 2
        %v927 = vadd.f32 %v925, %v926
        %v928 = vrot.slane %v927, 1
        %v929 = vadd.f32 %v927, %v928
        %v930 = vsel %vm346, %v764, 0.0
        %v931 = vsel %vm346, %v766, 0.0
        %v932 = vadd.f32 %v930, %v931
        %v933 = vrot.slane %v932, 4
        %v934 = vadd.f32 %v932, %v933
        %v935 = vrot.slane %v934, 2
        %v936 = vadd.f32 %v934, %v935
        %v937 = vrot.slane %v936, 1
        %v938 = vadd.f32 %v936, %v937
        %v939 = vsel %vm346, %v768, 0.0
        %v940 = vsel %vm346, %v770, 0.0
        %v941 = vadd.f32 %v939, %v940
        %v942 = vrot.slane %v941, 4
        %v943 = vadd.f32 %v941, %v942
        %v944 = vrot.slane %v943, 2
        %v945 = vadd.f32 %v943, %v944
        %v946 = vrot.slane %v945, 1
        %v947 = vadd.f32 %v945, %v946
        %v951 = vsel %vm400, %v920, %v911
        %v952 = vsel %vm496, %v929, %v951
        %v955 = vsel %vm400, %v947, %v938
        %v956 = vsel %vm346, %v952, 0
        %v958 = vsel %vm346, %v955, 0
        %960 = vmatprep.subr.mxu0 0.0
        %961 = vmatpush1.xpose.msra.mxu0 %v958
        %962 = vmatprep.subr.mxu0 0.0
        %963 = vmatpush1.xpose.msra.mxu0 0.0
        %964 = vmatprep.subr.mxu0 0.0
        %965 = vmatpush1.xpose.msra.mxu0 0.0
        %966 = vmatprep.subr.mxu0 0.0
        %967 = vmatpush1.xpose.msra.mxu0 0.0
        %968 = vmatprep.subr.mxu0 0.0
        %969 = vmatpush1.xpose.msra.mxu0 0.0
        %970 = vmatprep.subr.mxu0 0.0
        %971 = vmatpush1.xpose.msra.mxu0 0.0
        %972 = vmatprep.subr.mxu0 0.0
        %973 = vmatpush1.xpose.msra.mxu0 0.0
        %974 = vmatprep.subr.mxu0 0.0
        %975 = vmatpush1.xpose.msra.mxu0 0.0
        %976 = vmatprep.subr.mxu0 0.0
        %977 = vmatpush1.xpose.msra.mxu0 0.0
        %978 = vmatprep.subr.mxu0 0.0
        %979 = vmatpush1.xpose.msra.mxu0 0.0
        %980 = vmatprep.subr.mxu0 0.0
        %981 = vmatpush1.xpose.msra.mxu0 0.0
        %982 = vmatprep.subr.mxu0 0.0
        %983 = vmatpush1.xpose.msra.mxu0 0.0
        %984 = vmatprep.subr.mxu0 0.0
        %985 = vmatpush1.xpose.msra.mxu0 0.0
        %986 = vmatprep.subr.mxu0 0.0
        %987 = vmatpush1.xpose.msra.mxu0 0.0
        %988 = vmatprep.subr.mxu0 0.0
        %989 = vmatpush1.xpose.msra.mxu0 0.0
        %990 = vmatprep.subr.mxu0 0.0
        %991 = vmatpush1.xpose.msra.mxu0 0.0
        %992 = vmatprep.subr.mxu0 0.0
        %993 = vmatpush1.xpose.msra.mxu0 0.0
        %994 = vmatprep.subr.mxu0 0.0
        %995 = vmatpush1.xpose.msra.mxu0 0.0
        %996 = vmatprep.subr.mxu0 0.0
        %997 = vmatpush1.xpose.msra.mxu0 0.0
        %998 = vmatprep.subr.mxu0 0.0
        %999 = vmatpush1.xpose.msra.mxu0 0.0
        %1000 = vmatprep.subr.mxu0 0.0
        %1001 = vmatpush1.xpose.msra.mxu0 0.0
        %1002 = vmatprep.subr.mxu0 0.0
        %1003 = vmatpush1.xpose.msra.mxu0 0.0
        %1004 = vmatprep.subr.mxu0 0.0
        %1005 = vmatpush1.xpose.msra.mxu0 0.0
        %1006 = vmatprep.subr.mxu0 0.0
        %1007 = vmatpush1.xpose.msra.mxu0 0.0
        %1008 = vmatprep.subr.mxu0 0.0
        %1009 = vmatpush1.xpose.msra.mxu0 0.0
        %1010 = vmatprep.subr.mxu0 0.0
        %1011 = vmatpush1.xpose.msra.mxu0 0.0
        %1012 = vmatprep.subr.mxu0 0.0
        %1013 = vmatpush1.xpose.msra.mxu0 0.0
        %1014 = vmatprep.subr.mxu0 0.0
        %1015 = vmatpush1.xpose.msra.mxu0 0.0
        %1016 = vmatprep.subr.mxu0 0.0
        %1017 = vmatpush1.xpose.msra.mxu0 0.0
        %1018 = vmatprep.subr.mxu0 0.0
        %1019 = vmatpush1.xpose.msra.mxu0 0.0
        %1020 = vmatprep.subr.mxu0 0.0
        %1021 = vmatpush1.xpose.msra.mxu0 0.0
        %1022 = vmatprep.subr.mxu0 0.0
        %1023 = vmatpush1.xpose.msra.mxu0 0.0
        %1024 = vmatprep.mubr.f32.mxu0 0.0
        %1025 = vmatmul.mubr.f32.gmra.mrb[0].mxu0 %v956
        %v1026 = vpop.f32.mrb[0].mxu0
        %v1027 = vadd.f32 0.0, %v1026
        %v1028 = vpop.f32.mrb[0].mxu0
        %1029 = vdwg.mxu0
        %v1030 = vmul.f32 %v1027, 0.78125
        %vm1031 = vcmask 10240
        %1032 = vst.msk [vmem:[%s318] sm:$0x7] %vm1031, %v1030
        %p1033 = scmp.lt.s32.totalorder %s24, 1
        %s1034 = scalar_select %p1033, %s24, 1
        %p1035 = scmp.lt.s32.totalorder %s25, 0
        %s1036 = scalar_select %p1035, %s25, 0
        %s1037 = sadd.s32 %s1036, %s1034
        %s1038 = smul.addr %s1037, 4
        %s1039 = scalar_lea.vmem %s2, %s1038
        %s1040 = sand.u32 %s124, 1
        %s1041 = scalar_lea.sflag [#allocation3], %s1040
        %s1042 = sand.u32 %s124, 1
        %s1043 = smul.addr %s1042, 2
        %s1044 = scalar_lea.vmem [#allocation2], %s1043
        %p1045 = scmp.lt.s32.totalorder %s24, 1
        %s1046 = scalar_select %p1045, %s24, 1
        %p1047 = scmp.lt.s32.totalorder %s25, 0
        %s1048 = scalar_select %p1047, %s25, 0
        %s1049 = sadd.s32 %s1048, %s1046
        %s1050 = smul.addr %s1049, 4
        %s1051 = scalar_lea.vmem %s4, %s1050
        %s1052 = smul.u32 6, %s25
        %p1053 = scmp.lt.s32.totalorder %s24, 1
        %s1054 = scalar_select %p1053, %s24, 1
        %p1055 = scmp.lt.s32.totalorder %s1052, 5
        %s1056 = scalar_select %p1055, %s1052, 5
        %s1057 = smul.addr %s1054, 6
        %s1058 = sadd.s32 %s1056, %s1057
        %s1059 = smul.addr %s1058, 8
        %s1060 = scalar_lea.vmem %s5, %s1059
        // Predicated region
        $region29: #{tpu_custom_call.1} parent=27 // pred_check
          %p1061 = pneg %p106
        $region30: #{tpu_custom_call.1} parent=27 // pred_check_branch
          %1063 = sbr.rel (%p1061) target = $region32
        $region31: #{tpu_custom_call.1} parent=27 // pred_region
          _
        $region32: #{tpu_custom_call.1} parent=27 // pred_fallthru
          _
        // Predicated region
        $region33: #{tpu_custom_call.1} parent=27 // pred_check
          %p1064 = pneg %p134
        $region34: #{tpu_custom_call.1} parent=27 // pred_check_branch
          %1066 = sbr.rel (%p1064) target = $region36
        $region35: #{tpu_custom_call.1} parent=27 // pred_region
          %s1068 = ssub.s32 32, 32
          %1069 = vsyncadd %s1041, %s1068
          %s1070 = sadd.s32 %s25, %s24
          %s1071 = smul.addr %s1070, 32
          %s1072 = scalar_lea.hbm %s3, %s1071
          %s1074 = sshll.u32 %s1044, 4
          %s1075 = int_to_ptr.vmem [resolvable:$true] %s1074
          %1077 = dma.vmem_to_hbm [thread:$0]  %s1075, 32, %s1072, %s1041
        $region36: #{tpu_custom_call.1} parent=27 // pred_fallthru
          _
        // Predicated region
        $region37: #{tpu_custom_call.1} parent=27 // pred_check
          %p1078 = pneg %p162
        $region38: #{tpu_custom_call.1} parent=27 // pred_check_branch
          %1080 = sbr.rel (%p1078) target = $region40
        $region39: #{tpu_custom_call.1} parent=27 // pred_region
          _
        $region40: #{tpu_custom_call.1} parent=27 // pred_fallthru
          _
        // Predicated region
        $region41: #{tpu_custom_call.1} parent=27 // pred_check
          %p1081 = pneg %p190
        $region42: #{tpu_custom_call.1} parent=27 // pred_check_branch
          %1083 = sbr.rel (%p1081) target = $region44
        $region43: #{tpu_custom_call.1} parent=27 // pred_region
          %s1084 = smul.u32 6, %s25
        $region44: #{tpu_custom_call.1} parent=27 // pred_fallthru
          _
      $region28: #{tpu_custom_call.1} parent=5 // pred_fallthru
        _
      %p1085 = scmp.le.s32.totalorder 2, %s15
      // Predicated region
      $region45: #{tpu_custom_call.1} parent=5 // pred_check
        %p1086 = pneg %p1085
      $region46: #{tpu_custom_call.1} parent=5 // pred_check_branch
        %1088 = sbr.rel (%p1086) target = $region48
      $region47: #{tpu_custom_call.1} parent=5 // pred_region
        %s1089 = ssub.s32 %s15, 2
        // Predicated region
        $region49: #{tpu_custom_call.1} parent=47 // pred_check
          %p1090 = pneg %p112
        $region50: #{tpu_custom_call.1} parent=47 // pred_check_branch
          %1092 = sbr.rel (%p1090) target = $region52
        $region51: #{tpu_custom_call.1} parent=47 // pred_region
          %p1093 = scmp.lt.s32.totalorder %s26, 1
          %s1094 = scalar_select %p1093, %s26, 1
          %p1095 = scmp.lt.s32.totalorder %s27, 0
          %s1096 = scalar_select %p1095, %s27, 0
          %s1097 = sadd.s32 %s1096, %s1094
          %s1098 = smul.addr %s1097, 4
          %s1099 = scalar_lea.vmem %s2, %s1098
        $region52: #{tpu_custom_call.1} parent=47 // pred_fallthru
          _
        // Predicated region
        $region53: #{tpu_custom_call.1} parent=47 // pred_check
          %p1100 = pneg %p140
        $region54: #{tpu_custom_call.1} parent=47 // pred_check_branch
          %1102 = sbr.rel (%p1100) target = $region56
        $region55: #{tpu_custom_call.1} parent=47 // pred_region
          %s1103 = sand.u32 %s125, 1
          %s1104 = scalar_lea.sflag [#allocation3], %s1103
          %s1105 = sand.u32 %s125, 1
          %s1106 = smul.addr %s1105, 2
          %s1107 = scalar_lea.vmem [#allocation2], %s1106
          %1108 = dma.done %s1104, 32
        $region56: #{tpu_custom_call.1} parent=47 // pred_fallthru
          _
        // Predicated region
        $region57: #{tpu_custom_call.1} parent=47 // pred_check
          %p1109 = pneg %p168
        $region58: #{tpu_custom_call.1} parent=47 // pred_check_branch
          %1111 = sbr.rel (%p1109) target = $region60
        $region59: #{tpu_custom_call.1} parent=47 // pred_region
          %p1112 = scmp.lt.s32.totalorder %s26, 1
          %s1113 = scalar_select %p1112, %s26, 1
          %p1114 = scmp.lt.s32.totalorder %s27, 0
          %s1115 = scalar_select %p1114, %s27, 0
          %s1116 = sadd.s32 %s1115, %s1113
          %s1117 = smul.addr %s1116, 4
          %s1118 = scalar_lea.vmem %s4, %s1117
        $region60: #{tpu_custom_call.1} parent=47 // pred_fallthru
          _
        // Predicated region
        $region61: #{tpu_custom_call.1} parent=47 // pred_check
          %p1119 = pneg %p196
        $region62: #{tpu_custom_call.1} parent=47 // pred_check_branch
          %1121 = sbr.rel (%p1119) target = $region64
        $region63: #{tpu_custom_call.1} parent=47 // pred_region
          %s1122 = smul.u32 6, %s27
          %p1123 = scmp.lt.s32.totalorder %s26, 1
          %s1124 = scalar_select %p1123, %s26, 1
          %p1125 = scmp.lt.s32.totalorder %s1122, 5
          %s1126 = scalar_select %p1125, %s1122, 5
          %s1127 = smul.addr %s1124, 6
          %s1128 = sadd.s32 %s1126, %s1127
          %s1129 = smul.addr %s1128, 8
          %s1130 = scalar_lea.vmem %s5, %s1129
        $region64: #{tpu_custom_call.1} parent=47 // pred_fallthru
          _
      $region48: #{tpu_custom_call.1} parent=5 // pred_fallthru
        _
    $region6: #{tpu_custom_call.1} parent=1 // loop_footer
      %s19 = sadd.s32 1, %s15
    $region7: #{tpu_custom_call.1} parent=1 // loop_footer_branch
      %14 = sbr.rel target = $region3
    $region8: #{tpu_custom_call.1} parent=1 // loop_exit
      _
    %1131 = vsyncpa [#allocation3], 1
    %s1132 = scalar_lea.sflag [#allocation3], 1
    %1133 = vsyncpa %s1132, 1

</llo_original>
